<compile_context>
chip_gen: v7x
topology: tpu7x:2x2x1
jax: 0.10.0
libtpu: 0.0.40
codegen_flags: <defaults>
</compile_context>

<pallas_src>
import jax
import jax.numpy as jnp
from jax.experimental import pallas as pl
from jax.experimental.pallas import tpu as pltpu


def _identity_scalar_kernel(w_ref, o_ref):
    # 1-D f32[1] refs in SMEM: a single 32-bit scalar copy on the scalar path
    # (sld/sst), no VMEM tile, no masked vector load/store.
    o_ref[0] = w_ref[0]


def user_defined_layer_forward(weight: jax.Array) -> jax.Array:
    """Optimized Pallas-side equivalent of UserDefinedLayerWithParameters.

    The PyTorch forward() is empty (returns None, no compute), so the fastest
    correct implementation launches no kernel at all and exposes the
    registered parameter unchanged.  Note: callers must not treat the return
    value as a computed activation — PyTorch's forward() returns None.
    """
    return weight


def user_defined_layer_forward_device(weight: jax.Array) -> jax.Array:
    """Device-op fallback: identity copy of `weight` as a minimal Pallas kernel.

    Only use when a framework literally requires a device operation to touch
    the parameter.  The (1, 1) weight is flattened to a 1-D f32[1] so the SMEM
    reservation is a few bytes per ref rather than a padded 2-D block; the
    output is a fresh tiny buffer (no aliasing/donation of the live parameter).
    """
    flat = weight.reshape((1,))
    out_flat = pl.pallas_call(
        _identity_scalar_kernel,
        out_shape=jax.ShapeDtypeStruct((1,), weight.dtype),
        in_specs=[pl.BlockSpec(memory_space=pltpu.MemorySpace.SMEM)],
        out_specs=pl.BlockSpec(memory_space=pltpu.MemorySpace.SMEM),
        cost_estimate=pl.CostEstimate(
            flops=0, transcendentals=0, bytes_accessed=8
        ),
    )(flat)
    return out_flat.reshape(weight.shape)


def init_params():
    # nn.Parameter(torch.zeros(1, 1)) -> deterministic zeros, float32.
    return {"weight": jnp.zeros((1, 1), dtype=jnp.float32)}


if __name__ == "__main__":
    # PRNGKey kept for convention; the parameter init is deterministic zeros.
    _ = jax.random.PRNGKey(0)

    params = init_params()

    # Primary (optimized) path: no kernel launch, mirrors the empty forward().
    w = user_defined_layer_forward(params["weight"])
    w = jax.block_until_ready(w)
    assert w.shape == (1, 1)
    assert w.dtype == jnp.float32
    assert bool(jnp.all(w == 0.0))

    # Device-op fallback path: run the minimal Pallas kernel once and verify.
    out = user_defined_layer_forward_device(params["weight"])
    out = jax.block_until_ready(out)
    assert out.shape == (1, 1)
    assert out.dtype == jnp.float32
    assert bool(jnp.all(out == 0.0))

    print("KERNEL_OK")
</pallas_src>

<mosaic_0001>
module attributes {stable_mosaic.version = 11 : i64} {
  func.func @_identity_scalar_kernel(%arg0: memref<1xf32, #tpu.memory_space<smem>>, %arg1: memref<1xf32, #tpu.memory_space<smem>>) attributes {dimension_semantics = [], scalar_prefetch = 0 : i64, scratch_operands = 0 : i64, tpu.core_type = #tpu.core_type<tc>} {
    %c0 = arith.constant 0 : index
    %0 = memref.load %arg0[%c0] : memref<1xf32, #tpu.memory_space<smem>>
    %c0_0 = arith.constant 0 : index
    %1 = memref.load %arg1[%c0_0] : memref<1xf32, #tpu.memory_space<smem>>
    memref.store %0, %arg1[%c0_0] : memref<1xf32, #tpu.memory_space<smem>>
    return
  }
}

</mosaic_0001>

<llo_original>
// kernel: tpu_custom_call.1
$region0: #{tpu_custom_call.1}
  #allocation0 [shape = 'u32[]', space=smem, size = 0x4, offset = 0x4, fixed_abs, tag = 'smem constant byte address 0x4 - core index']
  #allocation1 [shape = 'u32[144,128]{1,0:T(1,128)}', space=vmem, size = 0x12000, scoped, tag = 'internal scratch']
  #allocation2 [shape = 'f32[1]{0:T(128)S(6)}', space=smem, size = 0x200, scoped, tag = 'scoped memory for tpu_custom_call.1']
  %s0 = inlined_call_operand.<no memory space> [shape: f32[1], index: 0, kind: input, shape index: {}]
  %s1 = inlined_call_operand.hbm [shape: f32[1], index: 1, kind: output, shape index: {}]
  %s2 = sld [smem:[#allocation0]]
  $region14: #{tpu_custom_call.1} parent=0
    _
  %s4 = ssub.s32 1, %s2
  %s5 = scalar_select 0, %s4, %s2
  %6 = sst [smem:[#allocation2]] %s0
  $region1: #{tpu_custom_call.1} parent=0
    #allocation3 [shape = 'u8[512]{0}', space=smem, size = 0x200, scoped, tag = 'output window, operand 0, single buffered']
    #allocation4 [shape = 's32[1]{0}', space=sflag, size = 0x4, scoped, tag = 'scoped memory for tpu_custom_call.1']
    %7 = vsyncpa [#allocation4], 0
    // Predicated region
    $region2: #{tpu_custom_call.1} parent=1 // pred_check
      _
    $region3: #{tpu_custom_call.1} parent=1 // pred_check_branch
      %9 = sbr.rel (0) target = $region5
    $region4: #{tpu_custom_call.1} parent=1 // pred_region
      _
    $region5: #{tpu_custom_call.1} parent=1 // pred_fallthru
      _
    %s10 = sld [smem:[#allocation2]]
    %s11 = scalar_lea.smem [#allocation3], 0
    %12 = sst [smem:[%s11]] %s10
    // Predicated region
    $region6: #{tpu_custom_call.1} parent=1 // pred_check
      _
    $region7: #{tpu_custom_call.1} parent=1 // pred_check_branch
      %14 = sbr.rel (0) target = $region9
    $region8: #{tpu_custom_call.1} parent=1 // pred_region
      %s16 = ssub.s32 16, 16
      %17 = vsyncadd [#allocation4], %s16
      %20 = dma.smem_to_hbm [#allocation3], 16, %s1, [#allocation4]
    $region9: #{tpu_custom_call.1} parent=1 // pred_fallthru
      _
    // Predicated region
    $region10: #{tpu_custom_call.1} parent=1 // pred_check
      _
    $region11: #{tpu_custom_call.1} parent=1 // pred_check_branch
      %22 = sbr.rel (0) target = $region13
    $region12: #{tpu_custom_call.1} parent=1 // pred_region
      %23 = dma.done [#allocation4], 16
    $region13: #{tpu_custom_call.1} parent=1 // pred_fallthru
      _
    %24 = sfence
    %25 = vsyncpa [#allocation4], 1

</llo_original>
